<compile_context>
chip_gen: v7x
topology: tpu7x:2x2x1
jax: 0.10.0
libtpu: 0.0.40
codegen_flags: <defaults>
</compile_context>

<pallas_src>
import functools

import jax
import jax.numpy as jnp
from jax.experimental import pallas as pl
from jax.experimental.pallas import tpu as pltpu

PACK = 8        # samples packed per 128-lane row (128 lanes / 16 features)
IN_F = 16
HID_F = 8
OUT_F = 2


def class_classifier_kernel(x_ref, w1_ref, b1_ref, w2_ref, b2_ref,
                            w2s_ref, b2s_ref, o_ref):
    # x: (tbr, 128) -- 8 samples per row, 16 features each.
    x = x_ref[...]

    # Layer 1: packed block-diagonal Linear(16 -> 8) + ReLU.  K=128 (lane-full).
    h = jnp.dot(x, w1_ref[...], preferred_element_type=jnp.float32) + b1_ref[...]
    h = jnp.maximum(h, 0.0)                                             # (tbr, 64)

    # Layer 2: packed block-diagonal Linear(8 -> 2), plus the pair-swapped
    # variant (swap folded into the weights) -- both matmuls issue off h.
    l = jnp.dot(h, w2_ref[...], preferred_element_type=jnp.float32) + b2_ref[...]      # (tbr, 16)
    other = jnp.dot(h, w2s_ref[...], preferred_element_type=jnp.float32) + b2s_ref[...]  # (tbr, 16)

    # 2-class log_softmax on adjacent lane pairs (closed form, no lane reduce).
    m = jnp.maximum(l, other)
    lse = m + jnp.log1p(jnp.exp(-jnp.abs(l - other)))
    o_ref[...] = l - lse


def _round_up(n, m):
    return ((n + m - 1) // m) * m


@functools.partial(jax.jit, static_argnames=("block_rows",))
def class_classifier(x, w1, b1, w2, b2, *, block_rows=4096):
    """Forward pass of Class_Classifier.

    x:  (B, 16)
    w1: (8, 16), b1: (8,)   -- PyTorch nn.Linear layout
    w2: (2, 8),  b2: (2,)
    returns (B, 2) float32 log-probabilities.
    """
    B = x.shape[0]
    xf = x.astype(jnp.float32)

    # ---- lane-dense packing: 8 samples per 128-lane row --------------------
    # Aligned fast path: no padded copy when B is already a multiple of PACK.
    b_pad = _round_up(B, PACK)
    if b_pad != B:                       # pad only the ragged tail (<= 7 samples)
        xf = jnp.pad(xf, ((0, b_pad - B), (0, 0)))
    rows = b_pad // PACK
    xp = xf.reshape(rows, PACK * IN_F)   # (rows, 128)

    # ---- block size: multiple of 8 rows, or the full row count -------------
    tbr = _round_up(max(1, min(block_rows, rows)), 8)
    if tbr >= rows:
        tbr = rows                       # single block == full array dim (always legal)
    num_blocks = pl.cdiv(rows, tbr)
    # Keep >= 2 grid steps when there is enough work so ("parallel",) can
    # shard across the two TensorCores on v7x.
    if num_blocks == 1 and rows >= 2048:
        tbr = _round_up(pl.cdiv(rows, 2), 8)
        num_blocks = pl.cdiv(rows, tbr)
    grid = (num_blocks,)

    # ---- block-diagonal replicated weights (built once, outside the kernel) -
    eye = jnp.eye(PACK, dtype=jnp.float32)
    w1f = w1.astype(jnp.float32)
    b1f = b1.astype(jnp.float32)
    w2f = w2.astype(jnp.float32)
    b2f = b2.astype(jnp.float32)

    w1p = jnp.kron(eye, w1f.T)                       # (128, 64)
    b1p = jnp.tile(b1f, PACK).reshape(1, PACK * HID_F)
    w2p = jnp.kron(eye, w2f.T)                       # (64, 16)
    b2p = jnp.tile(b2f, PACK).reshape(1, PACK * OUT_F)
    # Pair-swap folded into layer 2 (paired/"other" logit).
    w2s = jnp.kron(eye, w2f[::-1].T)                 # (64, 16)
    b2s = jnp.tile(b2f[::-1], PACK).reshape(1, PACK * OUT_F)

    n_samples = rows * PACK
    weight_bytes = 4 * (PACK * IN_F * PACK * HID_F + PACK * HID_F
                        + 2 * (PACK * HID_F * PACK * OUT_F + PACK * OUT_F))
    cost = pl.CostEstimate(
        flops=2 * n_samples * (IN_F * HID_F + 2 * HID_F * OUT_F),
        transcendentals=4 * n_samples,                      # exp + log1p per logit
        bytes_accessed=n_samples * (IN_F + OUT_F) * 4 + weight_bytes,
    )

    out_packed = pl.pallas_call(
        class_classifier_kernel,
        out_shape=jax.ShapeDtypeStruct((rows, PACK * OUT_F), jnp.float32),
        grid=grid,
        in_specs=[
            pl.BlockSpec((tbr, PACK * IN_F), lambda i: (i, 0)),            # x streams
            pl.BlockSpec((PACK * IN_F, PACK * HID_F), lambda i: (0, 0)),   # w1p resident
            pl.BlockSpec((1, PACK * HID_F), lambda i: (0, 0)),             # b1p resident
            pl.BlockSpec((PACK * HID_F, PACK * OUT_F), lambda i: (0, 0)),  # w2p resident
            pl.BlockSpec((1, PACK * OUT_F), lambda i: (0, 0)),             # b2p resident
            pl.BlockSpec((PACK * HID_F, PACK * OUT_F), lambda i: (0, 0)),  # w2s resident
            pl.BlockSpec((1, PACK * OUT_F), lambda i: (0, 0)),             # b2s resident
        ],
        out_specs=pl.BlockSpec((tbr, PACK * OUT_F), lambda i: (i, 0)),
        compiler_params=pltpu.CompilerParams(
            dimension_semantics=("parallel",),
        ),
        cost_estimate=cost,
    )(xp, w1p, b1p, w2p, b2p, w2s, b2s)

    # Unpack (rows, 16) -> (b_pad, 2) and drop the ragged tail (no-op if aligned).
    return out_packed.reshape(b_pad, OUT_F)[:B]


def _reference(x, w1, b1, w2, b2):
    h = jnp.maximum(x @ w1.T + b1, 0.0)
    logits = h @ w2.T + b2
    return jax.nn.log_softmax(logits, axis=1)


if __name__ == "__main__":
    key = jax.random.PRNGKey(0)
    k_x, k_w1, k_b1, k_w2, k_b2, k_x2, k_x3 = jax.random.split(key, 7)

    # Deterministic synthetic parameters matching nn.Linear shapes.
    w1 = jax.random.normal(k_w1, (8, 16), dtype=jnp.float32) * 0.25   # Linear(16, 8).weight
    b1 = jax.random.normal(k_b1, (8,), dtype=jnp.float32) * 0.1       # Linear(16, 8).bias
    w2 = jax.random.normal(k_w2, (2, 8), dtype=jnp.float32) * 0.25    # Linear(8, 2).weight
    b2 = jax.random.normal(k_b2, (2,), dtype=jnp.float32) * 0.1       # Linear(8, 2).bias

    # Primary test: small batch, multiple of the packing factor (aligned,
    # zero-copy path; single full-array block).
    B = 8
    x = jax.random.normal(k_x, (B, 16), dtype=jnp.float32)
    out = jax.block_until_ready(class_classifier(x, w1, b1, w2, b2))
    ref = _reference(x, w1, b1, w2, b2)
    assert out.shape == (B, 2)
    assert jnp.allclose(out, ref, atol=1e-5, rtol=1e-5), "mismatch vs reference (B=8)"

    # Ragged-tail test: batch not a multiple of the packing factor.
    B2 = 13
    x2 = jax.random.normal(k_x2, (B2, 16), dtype=jnp.float32)
    out2 = jax.block_until_ready(class_classifier(x2, w1, b1, w2, b2))
    ref2 = _reference(x2, w1, b1, w2, b2)
    assert out2.shape == (B2, 2)
    assert jnp.allclose(out2, ref2, atol=1e-5, rtol=1e-5), "mismatch vs reference (B=13)"

    # Multi-block + uneven last block test (small block_rows to keep it tiny).
    B3 = 324                       # -> 41 packed rows, 3 blocks of 16 (last partial)
    x3 = jax.random.normal(k_x3, (B3, 16), dtype=jnp.float32)
    out3 = jax.block_until_ready(class_classifier(x3, w1, b1, w2, b2, block_rows=16))
    ref3 = _reference(x3, w1, b1, w2, b2)
    assert out3.shape == (B3, 2)
    assert jnp.allclose(out3, ref3, atol=1e-5, rtol=1e-5), "mismatch vs reference (B=324)"

    print("KERNEL_OK")
</pallas_src>

<mosaic_0001>
module attributes {stable_mosaic.version = 11 : i64} {
  func.func @class_classifier_kernel(%arg0: i32, %arg1: memref<1x128xf32, #tpu.memory_space<vmem>>, %arg2: memref<128x64xf32, #tpu.memory_space<vmem>>, %arg3: memref<1x64xf32, #tpu.memory_space<vmem>>, %arg4: memref<64x16xf32, #tpu.memory_space<vmem>>, %arg5: memref<1x16xf32, #tpu.memory_space<vmem>>, %arg6: memref<64x16xf32, #tpu.memory_space<vmem>>, %arg7: memref<1x16xf32, #tpu.memory_space<vmem>>, %arg8: memref<1x16xf32, #tpu.memory_space<vmem>>) attributes {dimension_semantics = [#tpu.dimension_semantics<parallel>], iteration_bounds = array<i64: 1>, scalar_prefetch = 0 : i64, scratch_operands = 0 : i64, tpu.core_type = #tpu.core_type<tc>, window_params = [{transform_indices = @transform_0, window_bounds = array<i64: 1, 128>}, {pipeline_mode = #tpu.pipeline_mode<synchronous>, transform_indices = @transform_1, window_bounds = array<i64: 128, 64>}, {pipeline_mode = #tpu.pipeline_mode<synchronous>, transform_indices = @transform_2, window_bounds = array<i64: 1, 64>}, {pipeline_mode = #tpu.pipeline_mode<synchronous>, transform_indices = @transform_3, window_bounds = array<i64: 64, 16>}, {pipeline_mode = #tpu.pipeline_mode<synchronous>, transform_indices = @transform_4, window_bounds = array<i64: 1, 16>}, {pipeline_mode = #tpu.pipeline_mode<synchronous>, transform_indices = @transform_5, window_bounds = array<i64: 64, 16>}, {pipeline_mode = #tpu.pipeline_mode<synchronous>, transform_indices = @transform_6, window_bounds = array<i64: 1, 16>}, {transform_indices = @transform_7, window_bounds = array<i64: 1, 16>}]} {
    %c0 = arith.constant 0 : index
    %c0_0 = arith.constant 0 : index
    %0 = vector.load %arg1[%c0, %c0_0] : memref<1x128xf32, #tpu.memory_space<vmem>>, vector<1x128xf32>
    %c0_1 = arith.constant 0 : index
    %c0_2 = arith.constant 0 : index
    %1 = vector.load %arg2[%c0_1, %c0_2] : memref<128x64xf32, #tpu.memory_space<vmem>>, vector<128x64xf32>
    %cst = arith.constant dense<0.000000e+00> : vector<1x64xf32>
    %2 = tpu.matmul %0, %1, %cst {dimension_numbers = #tpu.dot_dimension_numbers<[1], [0], [0], [1], [0, 0, 1, 1], [], []>} : vector<1x128xf32>, vector<128x64xf32>, vector<1x64xf32> -> vector<1x64xf32>
    %c0_3 = arith.constant 0 : index
    %c0_4 = arith.constant 0 : index
    %3 = vector.load %arg3[%c0_3, %c0_4] : memref<1x64xf32, #tpu.memory_space<vmem>>, vector<1x64xf32>
    %4 = arith.addf %2, %3 : vector<1x64xf32>
    %cst_5 = arith.constant 0.000000e+00 : f32
    %5 = vector.broadcast %cst_5 : f32 to vector<1x64xf32>
    %6 = arith.maximumf %4, %5 : vector<1x64xf32>
    %c0_6 = arith.constant 0 : index
    %c0_7 = arith.constant 0 : index
    %7 = vector.load %arg4[%c0_6, %c0_7] : memref<64x16xf32, #tpu.memory_space<vmem>>, vector<64x16xf32>
    %cst_8 = arith.constant dense<0.000000e+00> : vector<1x16xf32>
    %8 = tpu.matmul %6, %7, %cst_8 {dimension_numbers = #tpu.dot_dimension_numbers<[1], [0], [0], [1], [0, 0, 1, 1], [], []>} : vector<1x64xf32>, vector<64x16xf32>, vector<1x16xf32> -> vector<1x16xf32>
    %c0_9 = arith.constant 0 : index
    %c0_10 = arith.constant 0 : index
    %9 = vector.load %arg5[%c0_9, %c0_10] : memref<1x16xf32, #tpu.memory_space<vmem>>, vector<1x16xf32>
    %10 = arith.addf %8, %9 : vector<1x16xf32>
    %c0_11 = arith.constant 0 : index
    %c0_12 = arith.constant 0 : index
    %11 = vector.load %arg6[%c0_11, %c0_12] : memref<64x16xf32, #tpu.memory_space<vmem>>, vector<64x16xf32>
    %cst_13 = arith.constant dense<0.000000e+00> : vector<1x16xf32>
    %12 = tpu.matmul %6, %11, %cst_13 {dimension_numbers = #tpu.dot_dimension_numbers<[1], [0], [0], [1], [0, 0, 1, 1], [], []>} : vector<1x64xf32>, vector<64x16xf32>, vector<1x16xf32> -> vector<1x16xf32>
    %c0_14 = arith.constant 0 : index
    %c0_15 = arith.constant 0 : index
    %13 = vector.load %arg7[%c0_14, %c0_15] : memref<1x16xf32, #tpu.memory_space<vmem>>, vector<1x16xf32>
    %14 = arith.addf %12, %13 : vector<1x16xf32>
    %15 = arith.maximumf %10, %14 : vector<1x16xf32>
    %16 = arith.subf %10, %14 : vector<1x16xf32>
    %17 = math.absf %16 : vector<1x16xf32>
    %cst_16 = arith.constant 0.000000e+00 : f32
    %18 = vector.broadcast %cst_16 : f32 to vector<1x16xf32>
    %19 = arith.subf %18, %17 : vector<1x16xf32>
    %20 = math.exp %19 : vector<1x16xf32>
    %21 = math.log1p %20 : vector<1x16xf32>
    %22 = arith.addf %15, %21 : vector<1x16xf32>
    %23 = arith.subf %10, %22 : vector<1x16xf32>
    %c0_17 = arith.constant 0 : index
    %c0_18 = arith.constant 0 : index
    %24 = vector.load %arg8[%c0_17, %c0_18] : memref<1x16xf32, #tpu.memory_space<vmem>>, vector<1x16xf32>
    tpu.vector_store %arg8[%c0_17, %c0_18], %23 {strides = array<i32>} : memref<1x16xf32, #tpu.memory_space<vmem>>, vector<1x16xf32>,
    return
  }
  func.func @transform_0(%arg0: i32) -> (i32, i32) {
    %c0_i32 = arith.constant 0 : i32
    %c0_i32_0 = arith.constant 0 : i32
    return %arg0, %c0_i32 : i32, i32
  }
  func.func @transform_1(%arg0: i32) -> (i32, i32) {
    %c0_i32 = arith.constant 0 : i32
    %c0_i32_0 = arith.constant 0 : i32
    %c0_i32_1 = arith.constant 0 : i32
    return %c0_i32, %c0_i32_0 : i32, i32
  }
  func.func @transform_2(%arg0: i32) -> (i32, i32) {
    %c0_i32 = arith.constant 0 : i32
    %c0_i32_0 = arith.constant 0 : i32
    %c0_i32_1 = arith.constant 0 : i32
    return %c0_i32, %c0_i32_0 : i32, i32
  }
  func.func @transform_3(%arg0: i32) -> (i32, i32) {
    %c0_i32 = arith.constant 0 : i32
    %c0_i32_0 = arith.constant 0 : i32
    %c0_i32_1 = arith.constant 0 : i32
    return %c0_i32, %c0_i32_0 : i32, i32
  }
  func.func @transform_4(%arg0: i32) -> (i32, i32) {
    %c0_i32 = arith.constant 0 : i32
    %c0_i32_0 = arith.constant 0 : i32
    %c0_i32_1 = arith.constant 0 : i32
    return %c0_i32, %c0_i32_0 : i32, i32
  }
  func.func @transform_5(%arg0: i32) -> (i32, i32) {
    %c0_i32 = arith.constant 0 : i32
    %c0_i32_0 = arith.constant 0 : i32
    %c0_i32_1 = arith.constant 0 : i32
    return %c0_i32, %c0_i32_0 : i32, i32
  }
  func.func @transform_6(%arg0: i32) -> (i32, i32) {
    %c0_i32 = arith.constant 0 : i32
    %c0_i32_0 = arith.constant 0 : i32
    %c0_i32_1 = arith.constant 0 : i32
    return %c0_i32, %c0_i32_0 : i32, i32
  }
  func.func @transform_7(%arg0: i32) -> (i32, i32) {
    %c0_i32 = arith.constant 0 : i32
    %c0_i32_0 = arith.constant 0 : i32
    return %arg0, %c0_i32 : i32, i32
  }
}

</mosaic_0001>

<llo_original>
// kernel: tile.18
$region0: #{tile.18}
  #allocation0 [shape = 's32[1]{0}', space=sflag, size = 0x4, scoped, tag = 'scoped memory for tile.18']
  %s0 = inlined_call_operand.vmem [shape: f32[8], index: 0, kind: input, shape index: {}]
  %s1 = inlined_call_operand.vmem [shape: f32[8,8], index: 1, kind: output, shape index: {}]
  // Predicated region
  $region2: #{tile.18} parent=0 // pred_check
    _
  $region3: #{tile.18} parent=0 // pred_check_branch
    %3 = sbr.rel (0) target = $region5
  $region4: #{tile.18} parent=0 // pred_region
    _
  $region5: #{tile.18} parent=0 // pred_fallthru
    _
  %v4 = vld [vmem:[%s0] ss:$0 sm:$0xff]
  %5 = vst [vmem:[%s1] sm:$0xff] %v4

// kernel: tile.19
$region0: #{tile.19}
  %s0 = inlined_call_operand.vmem [shape: f32[8,8], index: 0, kind: input, shape index: {}]
  %s1 = inlined_call_operand.vmem [shape: f32[1,64], index: 1, kind: output, shape index: {}]
  $region1: #{tile.19} parent=0
    #allocation0 [shape = 'u8[4096]{0}', space=vmem, size = 0x1000, scoped, tag = 'scoped mem for output reshape']
    %v2 = vld [vmem:[%s0] sm:$0x1]
    %vm3 = vcmask 64512
    %4 = vst.msk [vmem:[#allocation0] sm:$0x1] %vm3, %v2
    %s5 = scalar_lea.vmem %s0, 7
    %v6 = vld [vmem:[%s5] sm:$0x1]
    %7 = vrot.lane.b32.xlu0 %v6, 56
    %v8 = vpop.permute.xlu0 %7
    %vm9 = vcmask 523712
    %10 = vst.msk [vmem:[#allocation0] sm:$0x1] %vm9, %v8
    %s11 = scalar_lea.vmem %s0, 6
    %v12 = vld [vmem:[%s11] sm:$0x1]
    %13 = vrot.lane.b32.xlu0 %v12, 48
    %v14 = vpop.permute.xlu0 %13
    %vm15 = vcmask 458112
    %16 = vst.msk [vmem:[#allocation0] sm:$0x1] %vm15, %v14
    %s17 = scalar_lea.vmem %s0, 5
    %v18 = vld [vmem:[%s17] sm:$0x1]
    %19 = vrot.lane.b32.xlu0 %v18, 40
    %v20 = vpop.permute.xlu0 %19
    %vm21 = vcmask 392512
    %22 = vst.msk [vmem:[#allocation0] sm:$0x1] %vm21, %v20
    %s23 = scalar_lea.vmem %s0, 4
    %v24 = vld [vmem:[%s23] sm:$0x1]
    %25 = vrot.lane.b32.xlu0 %v24, 32
    %v26 = vpop.permute.xlu0 %25
    %vm27 = vcmask 326912
    %28 = vst.msk [vmem:[#allocation0] sm:$0x1] %vm27, %v26
    %s29 = scalar_lea.vmem %s0, 3
    %v30 = vld [vmem:[%s29] sm:$0x1]
    %31 = vrot.lane.b32.xlu0 %v30, 24
    %v32 = vpop.permute.xlu0 %31
    %vm33 = vcmask 261312
    %34 = vst.msk [vmem:[#allocation0] sm:$0x1] %vm33, %v32
    %s35 = scalar_lea.vmem %s0, 2
    %v36 = vld [vmem:[%s35] sm:$0x1]
    %37 = vrot.lane.b32.xlu0 %v36, 16
    %v38 = vpop.permute.xlu0 %37
    %vm39 = vcmask 195712
    %40 = vst.msk [vmem:[#allocation0] sm:$0x1] %vm39, %v38
    %s41 = scalar_lea.vmem %s0, 1
    %v42 = vld [vmem:[%s41] sm:$0x1]
    %43 = vrot.lane.b32.xlu0 %v42, 8
    %v44 = vpop.permute.xlu0 %43
    %vm45 = vcmask 130112
    %46 = vst.msk [vmem:[#allocation0] sm:$0x1] %vm45, %v44
    %s48 = sshllo.u32 0, 1
    %v50 = vld [vmem:[#allocation0] sm:%s48]
    %s51 = sshllo.u32 0, 1
    %52 = vst [vmem:[%s1] sm:%s51] %v50

// kernel: tile.23
$region0: #{tile.23}
  #allocation0 [shape = 's32[1]{0}', space=sflag, size = 0x4, scoped, tag = 'scoped memory for tile.23']
  %s0 = inlined_call_operand.vmem [shape: f32[2], index: 0, kind: input, shape index: {}]
  %s1 = inlined_call_operand.vmem [shape: f32[8,2], index: 1, kind: output, shape index: {}]
  // Predicated region
  $region2: #{tile.23} parent=0 // pred_check
    _
  $region3: #{tile.23} parent=0 // pred_check_branch
    %3 = sbr.rel (0) target = $region5
  $region4: #{tile.23} parent=0 // pred_region
    _
  $region5: #{tile.23} parent=0 // pred_fallthru
    _
  %v4 = vld [vmem:[%s0] ss:$0 sm:$0xff]
  %5 = vst [vmem:[%s1] sm:$0xff] %v4

// kernel: tile.24
$region0: #{tile.24}
  %s0 = inlined_call_operand.vmem [shape: f32[8,2], index: 0, kind: input, shape index: {}]
  %s1 = inlined_call_operand.vmem [shape: f32[1,16], index: 1, kind: output, shape index: {}]
  $region1: #{tile.24} parent=0
    #allocation0 [shape = 'u8[4096]{0}', space=vmem, size = 0x1000, scoped, tag = 'scoped mem for output reshape']
    %v2 = vld [vmem:[%s0] sm:$0x1]
    %vm3 = vcmask 15360
    %4 = vst.msk [vmem:[#allocation0] sm:$0x1] %vm3, %v2
    %s5 = scalar_lea.vmem %s0, 7
    %v6 = vld [vmem:[%s5] sm:$0x1]
    %7 = vrot.lane.b32.xlu0 %v6, 14
    %v8 = vpop.permute.xlu0 %7
    %vm9 = vcmask 130160
    %10 = vst.msk [vmem:[#allocation0] sm:$0x1] %vm9, %v8
    %s11 = scalar_lea.vmem %s0, 6
    %v12 = vld [vmem:[%s11] sm:$0x1]
    %13 = vrot.lane.b32.xlu0 %v12, 12
    %v14 = vpop.permute.xlu0 %13
    %vm15 = vcmask 113760
    %16 = vst.msk [vmem:[#allocation0] sm:$0x1] %vm15, %v14
    %s17 = scalar_lea.vmem %s0, 5
    %v18 = vld [vmem:[%s17] sm:$0x1]
    %19 = vrot.lane.b32.xlu0 %v18, 10
    %v20 = vpop.permute.xlu0 %19
    %vm21 = vcmask 97360
    %22 = vst.msk [vmem:[#allocation0] sm:$0x1] %vm21, %v20
    %s23 = scalar_lea.vmem %s0, 4
    %v24 = vld [vmem:[%s23] sm:$0x1]
    %25 = vrot.lane.b32.xlu0 %v24, 8
    %v26 = vpop.permute.xlu0 %25
    %vm27 = vcmask 80960
    %28 = vst.msk [vmem:[#allocation0] sm:$0x1] %vm27, %v26
    %s29 = scalar_lea.vmem %s0, 3
    %v30 = vld [vmem:[%s29] sm:$0x1]
    %31 = vrot.lane.b32.xlu0 %v30, 6
    %v32 = vpop.permute.xlu0 %31
    %vm33 = vcmask 64560
    %34 = vst.msk [vmem:[#allocation0] sm:$0x1] %vm33, %v32
    %s35 = scalar_lea.vmem %s0, 2
    %v36 = vld [vmem:[%s35] sm:$0x1]
    %37 = vrot.lane.b32.xlu0 %v36, 4
    %v38 = vpop.permute.xlu0 %37
    %vm39 = vcmask 48160
    %40 = vst.msk [vmem:[#allocation0] sm:$0x1] %vm39, %v38
    %s41 = scalar_lea.vmem %s0, 1
    %v42 = vld [vmem:[%s41] sm:$0x1]
    %43 = vrot.lane.b32.xlu0 %v42, 2
    %v44 = vpop.permute.xlu0 %43
    %vm45 = vcmask 31760
    %46 = vst.msk [vmem:[#allocation0] sm:$0x1] %vm45, %v44
    %s48 = sshllo.u32 0, 1
    %v50 = vld [vmem:[#allocation0] sm:%s48]
    %s51 = sshllo.u32 0, 1
    %52 = vst [vmem:[%s1] sm:%s51] %v50

// kernel: class_classifier.1
$region0: #{class_classifier.1}
  #allocation0 [shape = 'u32[]', space=smem, size = 0x4, offset = 0x4, fixed_abs, tag = 'smem constant byte address 0x4 - core index']
  #allocation1 [shape = 'u32[144,128]{1,0:T(1,128)}', space=vmem, size = 0x12000, scoped, tag = 'internal scratch']
  %s0 = inlined_call_operand.vmem [shape: f32[1,128], index: 0, kind: input, shape index: {}]
  %s1 = inlined_call_operand.vmem [shape: f32[128,64], index: 1, kind: input, shape index: {}]
  %s2 = inlined_call_operand.vmem [shape: f32[1,64], index: 2, kind: input, shape index: {}]
  %s3 = inlined_call_operand.vmem [shape: f32[64,16], index: 3, kind: input, shape index: {}]
  %s4 = inlined_call_operand.vmem [shape: f32[1,16], index: 4, kind: input, shape index: {}]
  %s5 = inlined_call_operand.vmem [shape: f32[64,16], index: 5, kind: input, shape index: {}]
  %s6 = inlined_call_operand.vmem [shape: f32[1,16], index: 6, kind: input, shape index: {}]
  %s7 = inlined_call_operand.vmem [shape: f32[1,16], index: 7, kind: output, shape index: {}]
  %s8 = sld [smem:[#allocation0]]
  $region38: #{class_classifier.1} parent=0
    _
  %s10 = ssub.s32 1, %s8
  %s11 = scalar_select 0, %s10, %s8
  // Predicated region
  $region2: #{class_classifier.1} parent=0 // pred_check
    _
  $region3: #{class_classifier.1} parent=0 // pred_check_branch
    %13 = sbr.rel (0) target = $region5
  $region4: #{class_classifier.1} parent=0 // pred_region
    _
  $region5: #{class_classifier.1} parent=0 // pred_fallthru
    _
  // Predicated region
  $region6: #{class_classifier.1} parent=0 // pred_check
    _
  $region7: #{class_classifier.1} parent=0 // pred_check_branch
    %15 = sbr.rel (0) target = $region9
  $region8: #{class_classifier.1} parent=0 // pred_region
    _
  $region9: #{class_classifier.1} parent=0 // pred_fallthru
    _
  // Predicated region
  $region10: #{class_classifier.1} parent=0 // pred_check
    _
  $region11: #{class_classifier.1} parent=0 // pred_check_branch
    %17 = sbr.rel (0) target = $region13
  $region12: #{class_classifier.1} parent=0 // pred_region
    _
  $region13: #{class_classifier.1} parent=0 // pred_fallthru
    _
  // Predicated region
  $region14: #{class_classifier.1} parent=0 // pred_check
    _
  $region15: #{class_classifier.1} parent=0 // pred_check_branch
    %19 = sbr.rel (0) target = $region17
  $region16: #{class_classifier.1} parent=0 // pred_region
    _
  $region17: #{class_classifier.1} parent=0 // pred_fallthru
    _
  // Predicated region
  $region18: #{class_classifier.1} parent=0 // pred_check
    _
  $region19: #{class_classifier.1} parent=0 // pred_check_branch
    %21 = sbr.rel (0) target = $region21
  $region20: #{class_classifier.1} parent=0 // pred_region
    _
  $region21: #{class_classifier.1} parent=0 // pred_fallthru
    _
  // Predicated region
  $region22: #{class_classifier.1} parent=0 // pred_check
    _
  $region23: #{class_classifier.1} parent=0 // pred_check_branch
    %23 = sbr.rel (0) target = $region25
  $region24: #{class_classifier.1} parent=0 // pred_region
    _
  $region25: #{class_classifier.1} parent=0 // pred_fallthru
    _
  // Predicated region
  $region26: #{class_classifier.1} parent=0 // pred_check
    _
  $region27: #{class_classifier.1} parent=0 // pred_check_branch
    %25 = sbr.rel (0) target = $region29
  $region28: #{class_classifier.1} parent=0 // pred_region
    _
  $region29: #{class_classifier.1} parent=0 // pred_fallthru
    _
  %v26 = vld [vmem:[%s0] sm:$0x1]
  %v27 = vld [vmem:[%s1] sm:$0xff]
  %v28 = vld [vmem:[%s1 + $0x8] sm:$0xff]
  %v29 = vld [vmem:[%s1 + $0x10] sm:$0xff]
  %v30 = vld [vmem:[%s1 + $0x18] sm:$0xff]
  %v31 = vld [vmem:[%s1 + $0x20] sm:$0xff]
  %v32 = vld [vmem:[%s1 + $0x28] sm:$0xff]
  %v33 = vld [vmem:[%s1 + $0x30] sm:$0xff]
  %v34 = vld [vmem:[%s1 + $0x38] sm:$0xff]
  %v35 = vld [vmem:[%s1 + $0x40] sm:$0xff]
  %v36 = vld [vmem:[%s1 + $0x48] sm:$0xff]
  %v37 = vld [vmem:[%s1 + $0x50] sm:$0xff]
  %v38 = vld [vmem:[%s1 + $0x58] sm:$0xff]
  %v39 = vld [vmem:[%s1 + $0x60] sm:$0xff]
  %v40 = vld [vmem:[%s1 + $0x68] sm:$0xff]
  %v41 = vld [vmem:[%s1 + $0x70] sm:$0xff]
  %v42 = vld [vmem:[%s1 + $0x78] sm:$0xff]
  %v43 = vld [vmem:[%s2] sm:$0x1]
  %44 = vmatprep.subr.mxu0 0.0
  %45 = vmatpush1.msra.mxu0 %v27
  %46 = vmatprep.subr.mxu0 0.0
  %47 = vmatpush1.msra.mxu0 %v28
  %48 = vmatprep.subr.mxu0 0.0
  %49 = vmatpush1.msra.mxu0 %v29
  %50 = vmatprep.subr.mxu0 0.0
  %51 = vmatpush1.msra.mxu0 %v30
  %52 = vmatprep.subr.mxu0 0.0
  %53 = vmatpush1.msra.mxu0 %v31
  %54 = vmatprep.subr.mxu0 0.0
  %55 = vmatpush1.msra.mxu0 %v32
  %56 = vmatprep.subr.mxu0 0.0
  %57 = vmatpush1.msra.mxu0 %v33
  %58 = vmatprep.subr.mxu0 0.0
  %59 = vmatpush1.msra.mxu0 %v34
  %60 = vmatprep.subr.mxu0 0.0
  %61 = vmatpush1.msra.mxu0 %v35
  %62 = vmatprep.subr.mxu0 0.0
  %63 = vmatpush1.msra.mxu0 %v36
  %64 = vmatprep.subr.mxu0 0.0
  %65 = vmatpush1.msra.mxu0 %v37
  %66 = vmatprep.subr.mxu0 0.0
  %67 = vmatpush1.msra.mxu0 %v38
  %68 = vmatprep.subr.mxu0 0.0
  %69 = vmatpush1.msra.mxu0 %v39
  %70 = vmatprep.subr.mxu0 0.0
  %71 = vmatpush1.msra.mxu0 %v40
  %72 = vmatprep.subr.mxu0 0.0
  %73 = vmatpush1.msra.mxu0 %v41
  %74 = vmatprep.subr.mxu0 0.0
  %75 = vmatpush1.msra.mxu0 %v42
  %76 = vmatprep.subr.mxu0 0.0
  %77 = vmatpush1.msra.mxu0 0.0
  %78 = vmatprep.subr.mxu0 0.0
  %79 = vmatpush1.msra.mxu0 0.0
  %80 = vmatprep.subr.mxu0 0.0
  %81 = vmatpush1.msra.mxu0 0.0
  %82 = vmatprep.subr.mxu0 0.0
  %83 = vmatpush1.msra.mxu0 0.0
  %84 = vmatprep.subr.mxu0 0.0
  %85 = vmatpush1.msra.mxu0 0.0
  %86 = vmatprep.subr.mxu0 0.0
  %87 = vmatpush1.msra.mxu0 0.0
  %88 = vmatprep.subr.mxu0 0.0
  %89 = vmatpush1.msra.mxu0 0.0
  %90 = vmatprep.subr.mxu0 0.0
  %91 = vmatpush1.msra.mxu0 0.0
  %92 = vmatprep.subr.mxu0 0.0
  %93 = vmatpush1.msra.mxu0 0.0
  %94 = vmatprep.subr.mxu0 0.0
  %95 = vmatpush1.msra.mxu0 0.0
  %96 = vmatprep.subr.mxu0 0.0
  %97 = vmatpush1.msra.mxu0 0.0
  %98 = vmatprep.subr.mxu0 0.0
  %99 = vmatpush1.msra.mxu0 0.0
  %100 = vmatprep.subr.mxu0 0.0
  %101 = vmatpush1.msra.mxu0 0.0
  %102 = vmatprep.subr.mxu0 0.0
  %103 = vmatpush1.msra.mxu0 0.0
  %104 = vmatprep.subr.mxu0 0.0
  %105 = vmatpush1.msra.mxu0 0.0
  %106 = vmatprep.subr.mxu0 0.0
  %107 = vmatpush1.msra.mxu0 0.0
  %108 = vmatprep.mubr.f32.mxu0 0.0
  %109 = vmatmul.mubr.f32.gmra.mrb[0].mxu0 %v26
  %v110 = vpop.f32.mrb[0].mxu0
  %v111 = vadd.f32 %v43, %v110
  %v112 = vpop.f32.mrb[0].mxu0
  %113 = vdwg.mxu0
  %v114 = vmax.f32 %v111, 0.0
  %v115 = vld [vmem:[%s3] sm:$0xff]
  %v116 = vld [vmem:[%s3 + $0x8] sm:$0xff]
  %v117 = vld [vmem:[%s3 + $0x10] sm:$0xff]
  %v118 = vld [vmem:[%s3 + $0x18] sm:$0xff]
  %v119 = vld [vmem:[%s3 + $0x20] sm:$0xff]
  %v120 = vld [vmem:[%s3 + $0x28] sm:$0xff]
  %v121 = vld [vmem:[%s3 + $0x30] sm:$0xff]
  %v122 = vld [vmem:[%s3 + $0x38] sm:$0xff]
  %v123 = vld [vmem:[%s4] sm:$0x1]
  %vm124 = vcmask 523264
  %v126 = vsel %vm124, %v114, 0
  %128 = vmatprep.subr.mxu0 0.0
  %129 = vmatpush1.msra.mxu0 %v115
  %130 = vmatprep.subr.mxu0 0.0
  %131 = vmatpush1.msra.mxu0 %v116
  %132 = vmatprep.subr.mxu0 0.0
  %133 = vmatpush1.msra.mxu0 %v117
  %134 = vmatprep.subr.mxu0 0.0
  %135 = vmatpush1.msra.mxu0 %v118
  %136 = vmatprep.subr.mxu0 0.0
  %137 = vmatpush1.msra.mxu0 %v119
  %138 = vmatprep.subr.mxu0 0.0
  %139 = vmatpush1.msra.mxu0 %v120
  %140 = vmatprep.subr.mxu0 0.0
  %141 = vmatpush1.msra.mxu0 %v121
  %142 = vmatprep.subr.mxu0 0.0
  %143 = vmatpush1.msra.mxu0 %v122
  %144 = vmatprep.subr.mxu0 0.0
  %145 = vmatpush1.msra.mxu0 0.0
  %146 = vmatprep.subr.mxu0 0.0
  %147 = vmatpush1.msra.mxu0 0.0
  %148 = vmatprep.subr.mxu0 0.0
  %149 = vmatpush1.msra.mxu0 0.0
  %150 = vmatprep.subr.mxu0 0.0
  %151 = vmatpush1.msra.mxu0 0.0
  %152 = vmatprep.subr.mxu0 0.0
  %153 = vmatpush1.msra.mxu0 0.0
  %154 = vmatprep.subr.mxu0 0.0
  %155 = vmatpush1.msra.mxu0 0.0
  %156 = vmatprep.subr.mxu0 0.0
  %157 = vmatpush1.msra.mxu0 0.0
  %158 = vmatprep.subr.mxu0 0.0
  %159 = vmatpush1.msra.mxu0 0.0
  %160 = vmatprep.subr.mxu0 0.0
  %161 = vmatpush1.msra.mxu0 0.0
  %162 = vmatprep.subr.mxu0 0.0
  %163 = vmatpush1.msra.mxu0 0.0
  %164 = vmatprep.subr.mxu0 0.0
  %165 = vmatpush1.msra.mxu0 0.0
  %166 = vmatprep.subr.mxu0 0.0
  %167 = vmatpush1.msra.mxu0 0.0
  %168 = vmatprep.subr.mxu0 0.0
  %169 = vmatpush1.msra.mxu0 0.0
  %170 = vmatprep.subr.mxu0 0.0
  %171 = vmatpush1.msra.mxu0 0.0
  %172 = vmatprep.subr.mxu0 0.0
  %173 = vmatpush1.msra.mxu0 0.0
  %174 = vmatprep.subr.mxu0 0.0
  %175 = vmatpush1.msra.mxu0 0.0
  %176 = vmatprep.subr.mxu0 0.0
  %177 = vmatpush1.msra.mxu0 0.0
  %178 = vmatprep.subr.mxu0 0.0
  %179 = vmatpush1.msra.mxu0 0.0
  %180 = vmatprep.subr.mxu0 0.0
  %181 = vmatpush1.msra.mxu0 0.0
  %182 = vmatprep.subr.mxu0 0.0
  %183 = vmatpush1.msra.mxu0 0.0
  %184 = vmatprep.subr.mxu0 0.0
  %185 = vmatpush1.msra.mxu0 0.0
  %186 = vmatprep.subr.mxu0 0.0
  %187 = vmatpush1.msra.mxu0 0.0
  %188 = vmatprep.subr.mxu0 0.0
  %189 = vmatpush1.msra.mxu0 0.0
  %190 = vmatprep.subr.mxu0 0.0
  %191 = vmatpush1.msra.mxu0 0.0
  %192 = vmatprep.mubr.f32.mxu0 0.0
  %193 = vmatmul.mubr.f32.gmra.mrb[0].mxu0 %v126
  %v194 = vpop.f32.mrb[0].mxu0
  %v195 = vadd.f32 %v123, %v194
  %v196 = vpop.f32.mrb[0].mxu0
  %197 = vdwg.mxu0
  %v198 = vld [vmem:[%s5] sm:$0xff]
  %v199 = vld [vmem:[%s5 + $0x8] sm:$0xff]
  %v200 = vld [vmem:[%s5 + $0x10] sm:$0xff]
  %v201 = vld [vmem:[%s5 + $0x18] sm:$0xff]
  %v202 = vld [vmem:[%s5 + $0x20] sm:$0xff]
  %v203 = vld [vmem:[%s5 + $0x28] sm:$0xff]
  %v204 = vld [vmem:[%s5 + $0x30] sm:$0xff]
  %v205 = vld [vmem:[%s5 + $0x38] sm:$0xff]
  %v206 = vld [vmem:[%s6] sm:$0x1]
  %207 = vmatprep.subr.mxu0 0.0
  %208 = vmatpush1.msra.mxu0 %v198
  %209 = vmatprep.subr.mxu0 0.0
  %210 = vmatpush1.msra.mxu0 %v199
  %211 = vmatprep.subr.mxu0 0.0
  %212 = vmatpush1.msra.mxu0 %v200
  %213 = vmatprep.subr.mxu0 0.0
  %214 = vmatpush1.msra.mxu0 %v201
  %215 = vmatprep.subr.mxu0 0.0
  %216 = vmatpush1.msra.mxu0 %v202
  %217 = vmatprep.subr.mxu0 0.0
  %218 = vmatpush1.msra.mxu0 %v203
  %219 = vmatprep.subr.mxu0 0.0
  %220 = vmatpush1.msra.mxu0 %v204
  %221 = vmatprep.subr.mxu0 0.0
  %222 = vmatpush1.msra.mxu0 %v205
  %223 = vmatprep.subr.mxu0 0.0
  %224 = vmatpush1.msra.mxu0 0.0
  %225 = vmatprep.subr.mxu0 0.0
  %226 = vmatpush1.msra.mxu0 0.0
  %227 = vmatprep.subr.mxu0 0.0
  %228 = vmatpush1.msra.mxu0 0.0
  %229 = vmatprep.subr.mxu0 0.0
  %230 = vmatpush1.msra.mxu0 0.0
  %231 = vmatprep.subr.mxu0 0.0
  %232 = vmatpush1.msra.mxu0 0.0
  %233 = vmatprep.subr.mxu0 0.0
  %234 = vmatpush1.msra.mxu0 0.0
  %235 = vmatprep.subr.mxu0 0.0
  %236 = vmatpush1.msra.mxu0 0.0
  %237 = vmatprep.subr.mxu0 0.0
  %238 = vmatpush1.msra.mxu0 0.0
  %239 = vmatprep.subr.mxu0 0.0
  %240 = vmatpush1.msra.mxu0 0.0
  %241 = vmatprep.subr.mxu0 0.0
  %242 = vmatpush1.msra.mxu0 0.0
  %243 = vmatprep.subr.mxu0 0.0
  %244 = vmatpush1.msra.mxu0 0.0
  %245 = vmatprep.subr.mxu0 0.0
  %246 = vmatpush1.msra.mxu0 0.0
  %247 = vmatprep.subr.mxu0 0.0
  %248 = vmatpush1.msra.mxu0 0.0
  %249 = vmatprep.subr.mxu0 0.0
  %250 = vmatpush1.msra.mxu0 0.0
  %251 = vmatprep.subr.mxu0 0.0
  %252 = vmatpush1.msra.mxu0 0.0
  %253 = vmatprep.subr.mxu0 0.0
  %254 = vmatpush1.msra.mxu0 0.0
  %255 = vmatprep.subr.mxu0 0.0
  %256 = vmatpush1.msra.mxu0 0.0
  %257 = vmatprep.subr.mxu0 0.0
  %258 = vmatpush1.msra.mxu0 0.0
  %259 = vmatprep.subr.mxu0 0.0
  %260 = vmatpush1.msra.mxu0 0.0
  %261 = vmatprep.subr.mxu0 0.0
  %262 = vmatpush1.msra.mxu0 0.0
  %263 = vmatprep.subr.mxu0 0.0
  %264 = vmatpush1.msra.mxu0 0.0
  %265 = vmatprep.subr.mxu0 0.0
  %266 = vmatpush1.msra.mxu0 0.0
  %267 = vmatprep.subr.mxu0 0.0
  %268 = vmatpush1.msra.mxu0 0.0
  %269 = vmatprep.subr.mxu0 0.0
  %270 = vmatpush1.msra.mxu0 0.0
  %271 = vmatprep.mubr.f32.mxu0 0.0
  %272 = vmatmul.mubr.f32.gmra.mrb[0].mxu0 %v126
  %v273 = vpop.f32.mrb[0].mxu0
  %v274 = vadd.f32 %v206, %v273
  %v275 = vpop.f32.mrb[0].mxu0
  %276 = vdwg.mxu0
  %v277 = vmax.f32 %v195, %v274
  %v278 = vsub.f32 %v195, %v274
  %v279 = vand.u32 2147483647, %v278
  %v280 = vsub.f32 0.0, %v279
  %v281 = vmul.f32 %v280, 1.442695
  %v282 = vpow.pop %v281
  %v283 = vadd.f32 %v282, 1.0
  %v284 = vlog2.pop %v283
  %v285 = vmul.f32 %v284, 0.6931472
  %v286 = vmul.f32 -0.5, %v282
  %v287 = vadd.f32 %v286, 1.0
  %v288 = vmul.f32 %v287, %v282
  %v289 = vand.u32 2147483647, %v282
  %vm290 = vcmp.lt.f32.partialorder %v289, 0.0004427343
  %v291 = vsel %vm290, %v288, %v285
  %v292 = vadd.f32 %v277, %v291
  %v293 = vsub.f32 %v195, %v292
  %vm294 = vcmask 122880
  %295 = vst.msk [vmem:[%s7] sm:$0x1] %vm294, %v293
  // Predicated region
  $region30: #{class_classifier.1} parent=0 // pred_check
    _
  $region31: #{class_classifier.1} parent=0 // pred_check_branch
    %297 = sbr.rel (0) target = $region33
  $region32: #{class_classifier.1} parent=0 // pred_region
    _
  $region33: #{class_classifier.1} parent=0 // pred_fallthru
    _
  // Predicated region
  $region34: #{class_classifier.1} parent=0 // pred_check
    _
  $region35: #{class_classifier.1} parent=0 // pred_check_branch
    %299 = sbr.rel (0) target = $region37
  $region36: #{class_classifier.1} parent=0 // pred_region
    _
  $region37: #{class_classifier.1} parent=0 // pred_fallthru
    _

</llo_original>
